<compile_context>
chip_gen: v7x
topology: tpu7x:2x2x1
jax: 0.10.0
libtpu: 0.0.40
codegen_flags: <defaults>
</compile_context>

<pallas_src>
import numpy as np
import jax
import jax.numpy as jnp
from jax.experimental import pallas as pl
from jax.experimental.pallas import tpu as pltpu

# ----------------------------- config (small, consistent with module) ------------------
LATENT_DIM = 32      # config.latent_dim
N_PTS = 4            # n_pts
BATCH = 2
SEQ_LEN = 90         # implied by the deconv stack: 1 -> 3 -> 9 -> 29 -> 90
EPS = 1e-5           # GroupNorm eps (PyTorch default)

# per layer: (C_in, C_out, kernel, stride, L_in, L_out)
LAYERS = [
    (LATENT_DIM,      LATENT_DIM // 2, 3, 1, 1,  3),
    (LATENT_DIM // 2, LATENT_DIM // 4, 5, 2, 3,  9),
    (LATENT_DIM // 4, LATENT_DIM // 8, 5, 3, 9,  29),
    (LATENT_DIM // 8, 2,               6, 3, 29, 90),
]

# true flattened feature counts per layer output (C_out * L_out)
FEAT1, FEAT2, FEAT3, FEAT4 = 48, 72, 116, 180
# lane-padded widths: intermediates 128, final output 2 x 128-wide panels
PAD1, PAD2, PAD3 = 128, 128, 128
OUT_PAD = 256

# ----------------------------- packed matrix slab (bf16, 128 lanes) --------------------
ROW_M1 = 0      # (32, 128)  real (32, 48)
ROW_M2 = 32     # (128, 128) real (48, 72)
ROW_M3 = 160    # (128, 128) real (72, 116)
ROW_M4A = 288   # (128, 128) real (116, 128)  -> output lanes [0, 128)
ROW_M4B = 416   # (128, 128) real (116, 52)   -> output lanes [128, 180)
MAT_ROWS, MAT_COLS = 544, 128

# ----------------------------- packed vector slab (f32, 128 lanes) ---------------------
# (8-aligned rows; biases / gamma / beta broadcast along rows inside the kernel)
VROW_B1, VROW_G1, VROW_BE1 = 0, 8, 16
VROW_B2, VROW_G2, VROW_BE2 = 24, 32, 40
VROW_B3, VROW_G3, VROW_BE3 = 48, 56, 64
VROW_B4A, VROW_B4B = 72, 80
VEC_ROWS, VEC_COLS = 88, 128


# ----------------------------- parameter setup (glue, plain JAX/numpy) -----------------
def init_params(key):
    params = {}
    keys = jax.random.split(key, 16)
    ki = 0
    for li, (C_in, C_out, K, s, L_in, L_out) in enumerate(LAYERS, start=1):
        params[f"w{li}"] = 0.1 * jax.random.normal(keys[ki], (C_in, C_out, K), jnp.float32); ki += 1
        params[f"b{li}"] = 0.1 * jax.random.normal(keys[ki], (C_out,), jnp.float32); ki += 1
        if li < 4:  # GroupNorm affine params
            params[f"g{li}"] = 1.0 + 0.1 * jax.random.normal(keys[ki], (C_out,), jnp.float32); ki += 1
            params[f"be{li}"] = 0.1 * jax.random.normal(keys[ki], (C_out,), jnp.float32); ki += 1
    return params


def build_deconv_matrix(w, stride, L_in):
    """Dense M such that flatten_CL(x) @ M == flatten_CL(conv_transpose1d(x, w))."""
    C_in, C_out, K = w.shape                     # PyTorch ConvTranspose1d weight layout
    L_out = (L_in - 1) * stride + K
    M = np.zeros((C_in, L_in, C_out, L_out), dtype=np.float32)
    for i in range(L_in):
        for t in range(K):
            M[:, i, :, i * stride + t] += w[:, :, t]
    return M.reshape(C_in * L_in, C_out * L_out)


def prepare_kernel_params(params):
    """Pack params into a bf16 matrix slab (544,128) and a f32 vector slab (88,128)."""
    mats = np.zeros((MAT_ROWS, MAT_COLS), np.float32)
    vecs = np.zeros((VEC_ROWS, VEC_COLS), np.float32)

    mat_rows = [ROW_M1, ROW_M2, ROW_M3]
    vec_rows = [(VROW_B1, VROW_G1, VROW_BE1),
                (VROW_B2, VROW_G2, VROW_BE2),
                (VROW_B3, VROW_G3, VROW_BE3)]
    for li in range(1, 4):
        C_in, C_out, K, s, L_in, L_out = LAYERS[li - 1]
        M = build_deconv_matrix(np.asarray(params[f"w{li}"], np.float32), s, L_in)
        r0 = mat_rows[li - 1]
        mats[r0:r0 + M.shape[0], :M.shape[1]] = M            # padded rows/cols stay 0
        rb, rg, rbe = vec_rows[li - 1]
        nfeat = C_out * L_out
        vecs[rb, :nfeat] = np.repeat(np.asarray(params[f"b{li}"], np.float32), L_out)
        vecs[rg, :nfeat] = np.repeat(np.asarray(params[f"g{li}"], np.float32), L_out)
        vecs[rbe, :nfeat] = np.repeat(np.asarray(params[f"be{li}"], np.float32), L_out)

    # layer 4: split the (116, 180) matrix into two 128-wide output panels
    C_in, C_out, K, s, L_in, L_out = LAYERS[3]
    M4 = build_deconv_matrix(np.asarray(params["w4"], np.float32), s, L_in)   # (116, 180)
    mats[ROW_M4A:ROW_M4A + M4.shape[0], :128] = M4[:, 0:128]
    mats[ROW_M4B:ROW_M4B + M4.shape[0], :FEAT4 - 128] = M4[:, 128:FEAT4]
    b4 = np.repeat(np.asarray(params["b4"], np.float32), L_out)               # (180,)
    vecs[VROW_B4A, :128] = b4[0:128]
    vecs[VROW_B4B, :FEAT4 - 128] = b4[128:FEAT4]

    # Padded-lane zero invariant: padded gamma/beta/bias lanes MUST stay zero so padded
    # activation lanes remain exactly 0 through every layer (GN re-zeros them, SiLU(0)=0,
    # tanh(0)=0).  Assert so future slab edits can't silently break it.
    assert np.all(vecs[VROW_G1, FEAT1:] == 0) and np.all(vecs[VROW_BE1, FEAT1:] == 0)
    assert np.all(vecs[VROW_G2, FEAT2:] == 0) and np.all(vecs[VROW_BE2, FEAT2:] == 0)
    assert np.all(vecs[VROW_G3, FEAT3:] == 0) and np.all(vecs[VROW_BE3, FEAT3:] == 0)
    assert np.all(vecs[VROW_B1, FEAT1:] == 0)
    assert np.all(vecs[VROW_B2, FEAT2:] == 0)
    assert np.all(vecs[VROW_B3, FEAT3:] == 0)
    assert np.all(vecs[VROW_B4B, FEAT4 - 128:] == 0)
    assert np.all(mats[ROW_M1 + LATENT_DIM:ROW_M2, :] == 0)
    assert np.all(mats[ROW_M2 + FEAT1:ROW_M3, :] == 0)
    assert np.all(mats[ROW_M3 + FEAT2:ROW_M4A, :] == 0)
    assert np.all(mats[ROW_M4A + FEAT3:ROW_M4B, :] == 0)
    assert np.all(mats[ROW_M4B + FEAT3:, :] == 0)

    return jnp.asarray(mats, jnp.bfloat16), jnp.asarray(vecs, jnp.float32)


# ----------------------------- Pallas kernel (hot path) --------------------------------
def _gn_silu(h, gamma, beta, n_feat):
    # GroupNorm(1, C) over the TRUE feature count (padded lanes are exactly zero and do
    # not contribute), then affine + SiLU.  Sum / sum-of-squares keeps the two lane
    # reductions independent; variance is clamped >= 0 (f32/bf16 cancellation guard).
    inv_n = 1.0 / float(n_feat)
    s = jnp.sum(h, axis=-1, keepdims=True)
    sq = jnp.sum(h * h, axis=-1, keepdims=True)
    mean = s * inv_n
    var = jnp.maximum(sq * inv_n - mean * mean, 0.0)
    h = (h - mean) * jax.lax.rsqrt(var + EPS)
    h = h * gamma + beta                  # padded lanes: gamma = beta = 0 -> stay 0
    return h * jax.nn.sigmoid(h)          # SiLU(0) = 0


def reconstruction_kernel(x_ref, m_ref, v_ref, out_ref):
    m, v = m_ref, v_ref
    h = x_ref[...]                                                          # (TM, 32) f32

    def mxu(a_f32, r0, rows):
        # bf16 x bf16 MXU matmul with f32 accumulation.
        return jnp.dot(a_f32.astype(jnp.bfloat16), m[r0:r0 + rows, :],
                       preferred_element_type=jnp.float32)

    # layer 1: ConvT(32->16, k3, s1) + GN + SiLU    (48 real lanes of 128)
    h = mxu(h, ROW_M1, 32) + v[VROW_B1:VROW_B1 + 1, :]
    h = _gn_silu(h, v[VROW_G1:VROW_G1 + 1, :], v[VROW_BE1:VROW_BE1 + 1, :], FEAT1)

    # layer 2: ConvT(16->8, k5, s2) + GN + SiLU     (72 real lanes of 128)
    h = mxu(h, ROW_M2, PAD1) + v[VROW_B2:VROW_B2 + 1, :]
    h = _gn_silu(h, v[VROW_G2:VROW_G2 + 1, :], v[VROW_BE2:VROW_BE2 + 1, :], FEAT2)

    # layer 3: ConvT(8->4, k5, s3) + GN + SiLU      (116 real lanes of 128)
    h = mxu(h, ROW_M3, PAD2) + v[VROW_B3:VROW_B3 + 1, :]
    h = _gn_silu(h, v[VROW_G3:VROW_G3 + 1, :], v[VROW_BE3:VROW_BE3 + 1, :], FEAT3)

    # layer 4: ConvT(4->2, k6, s3) + Tanh           (180 real lanes, two 128-wide panels)
    hb = h.astype(jnp.bfloat16)
    ya = jnp.dot(hb, m[ROW_M4A:ROW_M4A + PAD3, :],
                 preferred_element_type=jnp.float32) + v[VROW_B4A:VROW_B4A + 1, :]
    yb = jnp.dot(hb, m[ROW_M4B:ROW_M4B + PAD3, :],
                 preferred_element_type=jnp.float32) + v[VROW_B4B:VROW_B4B + 1, :]
    out_ref[:, 0:128] = jnp.tanh(ya)
    out_ref[:, 128:256] = jnp.tanh(yb)


def _choose_tiling(N):
    # Small N: a single grid step (no per-step overhead, no wasted MXU M-dim splits).
    # Large N: TM = 512 -> >= 2 "parallel" steps (v7x dual-TC sharding), ~roofline tiles,
    # well under scoped-VMEM limits (per-step VMEM ~1.5 MB at TM=512).
    n8 = ((N + 7) // 8) * 8
    if n8 <= 512:
        return n8, n8
    TM = 512
    return TM, ((N + TM - 1) // TM) * TM


def _reconstruction_forward(zq, mats, vecs):
    # zq: (B, n_pts, latent_dim)  ~  PyTorch zq.reshape(-1, latent_dim, 1)
    B = zq.shape[0]
    x = zq.reshape(-1, LATENT_DIM).astype(jnp.float32)                      # (N, 32), L0 == 1
    N = x.shape[0]
    TM, Np = _choose_tiling(N)
    if Np != N:
        x = jnp.pad(x, ((0, Np - N), (0, 0)))

    out_pad = pl.pallas_call(
        reconstruction_kernel,
        out_shape=jax.ShapeDtypeStruct((Np, OUT_PAD), jnp.float32),
        grid_spec=pltpu.PrefetchScalarGridSpec(
            num_scalar_prefetch=0,
            grid=(Np // TM,),
            in_specs=[
                pl.BlockSpec((TM, LATENT_DIM), lambda i: (i, 0)),           # activation stream
                pl.BlockSpec((MAT_ROWS, MAT_COLS), lambda i: (0, 0)),       # bf16 matrices (DMA'd once)
                pl.BlockSpec((VEC_ROWS, VEC_COLS), lambda i: (0, 0)),       # f32 bias/gamma/beta
            ],
            out_specs=pl.BlockSpec((TM, OUT_PAD), lambda i: (i, 0)),
        ),
        compiler_params=pltpu.CompilerParams(dimension_semantics=("parallel",)),
    )(x, mats, vecs)

    # Epilogue (crop padding + view + permute) stays in XLA but is fused under the same
    # jax.jit -> single copy instead of extra full HBM round trips.
    out_flat = out_pad[:N, :FEAT4]
    out = out_flat.reshape(B, N_PTS, 2, SEQ_LEN)
    # TODO(synk): the (B, n_pts, 2, seq_len) -> (B, seq_len, n_pts, 2) permute (last dim 2)
    # has no lane-dense in-kernel equivalent; it is left to the fused XLA epilogue.
    return jnp.transpose(out, (0, 3, 1, 2))                                 # (B, seq_len, n_pts, 2)


reconstruction_forward = jax.jit(_reconstruction_forward)


# ----------------------------- numpy reference (for verification) ----------------------
def ref_forward_np(zq, params):
    x = np.asarray(zq, np.float64).reshape(-1, LATENT_DIM, 1)
    for li, (C_in, C_out, K, s, L_in, L_out) in enumerate(LAYERS, start=1):
        w = np.asarray(params[f"w{li}"], np.float64)
        b = np.asarray(params[f"b{li}"], np.float64)
        N = x.shape[0]
        y = np.zeros((N, C_out, L_out), np.float64)
        for i in range(L_in):
            for t in range(K):
                y[:, :, i * s + t] += np.einsum("nc,co->no", x[:, :, i], w[:, :, t])
        y += b[None, :, None]
        if li < 4:
            g = np.asarray(params[f"g{li}"], np.float64)
            be = np.asarray(params[f"be{li}"], np.float64)
            mean = y.reshape(N, -1).mean(axis=1)[:, None, None]
            var = ((y - mean) ** 2).reshape(N, -1).mean(axis=1)[:, None, None]
            y = (y - mean) / np.sqrt(var + EPS)
            y = y * g[None, :, None] + be[None, :, None]
            y = y / (1.0 + np.exp(-y))           # SiLU
        else:
            y = np.tanh(y)
        x = y
    out = x.reshape(-1, N_PTS, 2, SEQ_LEN).transpose(0, 3, 1, 2)
    return out


# ----------------------------- main -----------------------------------------------------
if __name__ == "__main__":
    key = jax.random.PRNGKey(0)
    pkey, xkey = jax.random.split(key)
    params = init_params(pkey)
    zq = jax.random.normal(xkey, (BATCH, N_PTS, LATENT_DIM), jnp.float32)

    mats, vecs = prepare_kernel_params(params)
    out = jax.block_until_ready(reconstruction_forward(zq, mats, vecs))

    assert out.shape == (BATCH, SEQ_LEN, N_PTS, 2), out.shape
    ref = ref_forward_np(np.asarray(zq), params)
    err = float(np.max(np.abs(np.asarray(out, np.float64) - ref)))
    # Tolerance accounts for bf16 MXU operands (per perf review) vs the f64 reference.
    assert err < 1e-1, err
    print("KERNEL_OK")
</pallas_src>

<mosaic_0001>
module attributes {stable_mosaic.version = 11 : i64} {
  func.func @reconstruction_kernel(%arg0: i32, %arg1: memref<8x32xf32, #tpu.memory_space<vmem>>, %arg2: memref<544x128xbf16, #tpu.memory_space<vmem>>, %arg3: memref<88x128xf32, #tpu.memory_space<vmem>>, %arg4: memref<8x256xf32, #tpu.memory_space<vmem>>) attributes {dimension_semantics = [#tpu.dimension_semantics<parallel>], iteration_bounds = array<i64: 1>, scalar_prefetch = 0 : i64, scratch_operands = 0 : i64, tpu.core_type = #tpu.core_type<tc>, window_params = [{transform_indices = @transform_0, window_bounds = array<i64: 8, 32>}, {pipeline_mode = #tpu.pipeline_mode<synchronous>, transform_indices = @transform_1, window_bounds = array<i64: 544, 128>}, {pipeline_mode = #tpu.pipeline_mode<synchronous>, transform_indices = @transform_2, window_bounds = array<i64: 88, 128>}, {transform_indices = @transform_3, window_bounds = array<i64: 8, 256>}]} {
    %c0 = arith.constant 0 : index
    %c0_0 = arith.constant 0 : index
    %0 = vector.load %arg1[%c0, %c0_0] : memref<8x32xf32, #tpu.memory_space<vmem>>, vector<8x32xf32>
    %1 = arith.truncf %0 : vector<8x32xf32> to vector<8x32xbf16>
    %c0_1 = arith.constant 0 : index
    %c0_2 = arith.constant 0 : index
    %2 = vector.load %arg2[%c0_1, %c0_2] : memref<544x128xbf16, #tpu.memory_space<vmem>>, vector<32x128xbf16>
    %cst = arith.constant dense<0.000000e+00> : vector<8x128xf32>
    %3 = tpu.matmul %1, %2, %cst {dimension_numbers = #tpu.dot_dimension_numbers<[1], [0], [0], [1], [0, 0, 1, 1], [], []>} : vector<8x32xbf16>, vector<32x128xbf16>, vector<8x128xf32> -> vector<8x128xf32>
    %c0_3 = arith.constant 0 : index
    %c0_4 = arith.constant 0 : index
    %4 = vector.load %arg3[%c0_3, %c0_4] : memref<88x128xf32, #tpu.memory_space<vmem>>, vector<1x128xf32>
    %5 = vector.broadcast %4 : vector<1x128xf32> to vector<8x128xf32>
    %6 = arith.addf %3, %5 : vector<8x128xf32>
    %c8 = arith.constant 8 : index
    %c0_5 = arith.constant 0 : index
    %7 = vector.load %arg3[%c8, %c0_5] : memref<88x128xf32, #tpu.memory_space<vmem>>, vector<1x128xf32>
    %c16 = arith.constant 16 : index
    %c0_6 = arith.constant 0 : index
    %8 = vector.load %arg3[%c16, %c0_6] : memref<88x128xf32, #tpu.memory_space<vmem>>, vector<1x128xf32>
    %cst_7 = arith.constant dense<0.000000e+00> : vector<8xf32>
    %9 = vector.multi_reduction <add>, %6, %cst_7 [1] : vector<8x128xf32> to vector<8xf32>
    %10 = vector.shape_cast %9 : vector<8xf32> to vector<8x1xf32>
    %11 = arith.mulf %6, %6 : vector<8x128xf32>
    %cst_8 = arith.constant dense<0.000000e+00> : vector<8xf32>
    %12 = vector.multi_reduction <add>, %11, %cst_8 [1] : vector<8x128xf32> to vector<8xf32>
    %13 = vector.shape_cast %12 : vector<8xf32> to vector<8x1xf32>
    %cst_9 = arith.constant 0.020833334 : f32
    %14 = vector.broadcast %cst_9 : f32 to vector<8x1xf32>
    %15 = arith.mulf %10, %14 : vector<8x1xf32>
    %cst_10 = arith.constant 0.020833334 : f32
    %16 = vector.broadcast %cst_10 : f32 to vector<8x1xf32>
    %17 = arith.mulf %13, %16 : vector<8x1xf32>
    %18 = arith.mulf %15, %15 : vector<8x1xf32>
    %19 = arith.subf %17, %18 : vector<8x1xf32>
    %cst_11 = arith.constant 0.000000e+00 : f32
    %20 = vector.broadcast %cst_11 : f32 to vector<8x1xf32>
    %21 = arith.maximumf %19, %20 : vector<8x1xf32>
    %22 = vector.broadcast %15 : vector<8x1xf32> to vector<8x128xf32>
    %23 = arith.subf %6, %22 : vector<8x128xf32>
    %cst_12 = arith.constant 9.99999974E-6 : f32
    %24 = vector.broadcast %cst_12 : f32 to vector<8x1xf32>
    %25 = arith.addf %21, %24 : vector<8x1xf32>
    %26 = math.rsqrt %25 : vector<8x1xf32>
    %27 = vector.broadcast %26 : vector<8x1xf32> to vector<8x128xf32>
    %28 = arith.mulf %23, %27 : vector<8x128xf32>
    %29 = vector.broadcast %7 : vector<1x128xf32> to vector<8x128xf32>
    %30 = arith.mulf %28, %29 : vector<8x128xf32>
    %31 = vector.broadcast %8 : vector<1x128xf32> to vector<8x128xf32>
    %32 = arith.addf %30, %31 : vector<8x128xf32>
    %33 = arith.negf %32 : vector<8x128xf32>
    %34 = math.exp %33 : vector<8x128xf32>
    %cst_13 = arith.constant 1.000000e+00 : f32
    %35 = vector.broadcast %cst_13 : f32 to vector<8x128xf32>
    %36 = arith.addf %35, %34 : vector<8x128xf32>
    %37 = arith.divf %35, %36 : vector<8x128xf32>
    %38 = arith.mulf %32, %37 : vector<8x128xf32>
    %39 = arith.truncf %38 : vector<8x128xf32> to vector<8x128xbf16>
    %c32 = arith.constant 32 : index
    %c0_14 = arith.constant 0 : index
    %40 = vector.load %arg2[%c32, %c0_14] : memref<544x128xbf16, #tpu.memory_space<vmem>>, vector<128x128xbf16>
    %cst_15 = arith.constant dense<0.000000e+00> : vector<8x128xf32>
    %41 = tpu.matmul %39, %40, %cst_15 {dimension_numbers = #tpu.dot_dimension_numbers<[1], [0], [0], [1], [0, 0, 1, 1], [], []>} : vector<8x128xbf16>, vector<128x128xbf16>, vector<8x128xf32> -> vector<8x128xf32>
    %c24 = arith.constant 24 : index
    %c0_16 = arith.constant 0 : index
    %42 = vector.load %arg3[%c24, %c0_16] : memref<88x128xf32, #tpu.memory_space<vmem>>, vector<1x128xf32>
    %43 = vector.broadcast %42 : vector<1x128xf32> to vector<8x128xf32>
    %44 = arith.addf %41, %43 : vector<8x128xf32>
    %c32_17 = arith.constant 32 : index
    %c0_18 = arith.constant 0 : index
    %45 = vector.load %arg3[%c32_17, %c0_18] : memref<88x128xf32, #tpu.memory_space<vmem>>, vector<1x128xf32>
    %c40 = arith.constant 40 : index
    %c0_19 = arith.constant 0 : index
    %46 = vector.load %arg3[%c40, %c0_19] : memref<88x128xf32, #tpu.memory_space<vmem>>, vector<1x128xf32>
    %cst_20 = arith.constant dense<0.000000e+00> : vector<8xf32>
    %47 = vector.multi_reduction <add>, %44, %cst_20 [1] : vector<8x128xf32> to vector<8xf32>
    %48 = vector.shape_cast %47 : vector<8xf32> to vector<8x1xf32>
    %49 = arith.mulf %44, %44 : vector<8x128xf32>
    %cst_21 = arith.constant dense<0.000000e+00> : vector<8xf32>
    %50 = vector.multi_reduction <add>, %49, %cst_21 [1] : vector<8x128xf32> to vector<8xf32>
    %51 = vector.shape_cast %50 : vector<8xf32> to vector<8x1xf32>
    %cst_22 = arith.constant 0.013888889 : f32
    %52 = vector.broadcast %cst_22 : f32 to vector<8x1xf32>
    %53 = arith.mulf %48, %52 : vector<8x1xf32>
    %cst_23 = arith.constant 0.013888889 : f32
    %54 = vector.broadcast %cst_23 : f32 to vector<8x1xf32>
    %55 = arith.mulf %51, %54 : vector<8x1xf32>
    %56 = arith.mulf %53, %53 : vector<8x1xf32>
    %57 = arith.subf %55, %56 : vector<8x1xf32>
    %cst_24 = arith.constant 0.000000e+00 : f32
    %58 = vector.broadcast %cst_24 : f32 to vector<8x1xf32>
    %59 = arith.maximumf %57, %58 : vector<8x1xf32>
    %60 = vector.broadcast %53 : vector<8x1xf32> to vector<8x128xf32>
    %61 = arith.subf %44, %60 : vector<8x128xf32>
    %cst_25 = arith.constant 9.99999974E-6 : f32
    %62 = vector.broadcast %cst_25 : f32 to vector<8x1xf32>
    %63 = arith.addf %59, %62 : vector<8x1xf32>
    %64 = math.rsqrt %63 : vector<8x1xf32>
    %65 = vector.broadcast %64 : vector<8x1xf32> to vector<8x128xf32>
    %66 = arith.mulf %61, %65 : vector<8x128xf32>
    %67 = vector.broadcast %45 : vector<1x128xf32> to vector<8x128xf32>
    %68 = arith.mulf %66, %67 : vector<8x128xf32>
    %69 = vector.broadcast %46 : vector<1x128xf32> to vector<8x128xf32>
    %70 = arith.addf %68, %69 : vector<8x128xf32>
    %71 = arith.negf %70 : vector<8x128xf32>
    %72 = math.exp %71 : vector<8x128xf32>
    %cst_26 = arith.constant 1.000000e+00 : f32
    %73 = vector.broadcast %cst_26 : f32 to vector<8x128xf32>
    %74 = arith.addf %73, %72 : vector<8x128xf32>
    %75 = arith.divf %73, %74 : vector<8x128xf32>
    %76 = arith.mulf %70, %75 : vector<8x128xf32>
    %77 = arith.truncf %76 : vector<8x128xf32> to vector<8x128xbf16>
    %c160 = arith.constant 160 : index
    %c0_27 = arith.constant 0 : index
    %78 = vector.load %arg2[%c160, %c0_27] : memref<544x128xbf16, #tpu.memory_space<vmem>>, vector<128x128xbf16>
    %cst_28 = arith.constant dense<0.000000e+00> : vector<8x128xf32>
    %79 = tpu.matmul %77, %78, %cst_28 {dimension_numbers = #tpu.dot_dimension_numbers<[1], [0], [0], [1], [0, 0, 1, 1], [], []>} : vector<8x128xbf16>, vector<128x128xbf16>, vector<8x128xf32> -> vector<8x128xf32>
    %c48 = arith.constant 48 : index
    %c0_29 = arith.constant 0 : index
    %80 = vector.load %arg3[%c48, %c0_29] : memref<88x128xf32, #tpu.memory_space<vmem>>, vector<1x128xf32>
    %81 = vector.broadcast %80 : vector<1x128xf32> to vector<8x128xf32>
    %82 = arith.addf %79, %81 : vector<8x128xf32>
    %c56 = arith.constant 56 : index
    %c0_30 = arith.constant 0 : index
    %83 = vector.load %arg3[%c56, %c0_30] : memref<88x128xf32, #tpu.memory_space<vmem>>, vector<1x128xf32>
    %c64 = arith.constant 64 : index
    %c0_31 = arith.constant 0 : index
    %84 = vector.load %arg3[%c64, %c0_31] : memref<88x128xf32, #tpu.memory_space<vmem>>, vector<1x128xf32>
    %cst_32 = arith.constant dense<0.000000e+00> : vector<8xf32>
    %85 = vector.multi_reduction <add>, %82, %cst_32 [1] : vector<8x128xf32> to vector<8xf32>
    %86 = vector.shape_cast %85 : vector<8xf32> to vector<8x1xf32>
    %87 = arith.mulf %82, %82 : vector<8x128xf32>
    %cst_33 = arith.constant dense<0.000000e+00> : vector<8xf32>
    %88 = vector.multi_reduction <add>, %87, %cst_33 [1] : vector<8x128xf32> to vector<8xf32>
    %89 = vector.shape_cast %88 : vector<8xf32> to vector<8x1xf32>
    %cst_34 = arith.constant 8.620690e-03 : f32
    %90 = vector.broadcast %cst_34 : f32 to vector<8x1xf32>
    %91 = arith.mulf %86, %90 : vector<8x1xf32>
    %cst_35 = arith.constant 8.620690e-03 : f32
    %92 = vector.broadcast %cst_35 : f32 to vector<8x1xf32>
    %93 = arith.mulf %89, %92 : vector<8x1xf32>
    %94 = arith.mulf %91, %91 : vector<8x1xf32>
    %95 = arith.subf %93, %94 : vector<8x1xf32>
    %cst_36 = arith.constant 0.000000e+00 : f32
    %96 = vector.broadcast %cst_36 : f32 to vector<8x1xf32>
    %97 = arith.maximumf %95, %96 : vector<8x1xf32>
    %98 = vector.broadcast %91 : vector<8x1xf32> to vector<8x128xf32>
    %99 = arith.subf %82, %98 : vector<8x128xf32>
    %cst_37 = arith.constant 9.99999974E-6 : f32
    %100 = vector.broadcast %cst_37 : f32 to vector<8x1xf32>
    %101 = arith.addf %97, %100 : vector<8x1xf32>
    %102 = math.rsqrt %101 : vector<8x1xf32>
    %103 = vector.broadcast %102 : vector<8x1xf32> to vector<8x128xf32>
    %104 = arith.mulf %99, %103 : vector<8x128xf32>
    %105 = vector.broadcast %83 : vector<1x128xf32> to vector<8x128xf32>
    %106 = arith.mulf %104, %105 : vector<8x128xf32>
    %107 = vector.broadcast %84 : vector<1x128xf32> to vector<8x128xf32>
    %108 = arith.addf %106, %107 : vector<8x128xf32>
    %109 = arith.negf %108 : vector<8x128xf32>
    %110 = math.exp %109 : vector<8x128xf32>
    %cst_38 = arith.constant 1.000000e+00 : f32
    %111 = vector.broadcast %cst_38 : f32 to vector<8x128xf32>
    %112 = arith.addf %111, %110 : vector<8x128xf32>
    %113 = arith.divf %111, %112 : vector<8x128xf32>
    %114 = arith.mulf %108, %113 : vector<8x128xf32>
    %115 = arith.truncf %114 : vector<8x128xf32> to vector<8x128xbf16>
    %c288 = arith.constant 288 : index
    %c0_39 = arith.constant 0 : index
    %116 = vector.load %arg2[%c288, %c0_39] : memref<544x128xbf16, #tpu.memory_space<vmem>>, vector<128x128xbf16>
    %cst_40 = arith.constant dense<0.000000e+00> : vector<8x128xf32>
    %117 = tpu.matmul %115, %116, %cst_40 {dimension_numbers = #tpu.dot_dimension_numbers<[1], [0], [0], [1], [0, 0, 1, 1], [], []>} : vector<8x128xbf16>, vector<128x128xbf16>, vector<8x128xf32> -> vector<8x128xf32>
    %c72 = arith.constant 72 : index
    %c0_41 = arith.constant 0 : index
    %118 = vector.load %arg3[%c72, %c0_41] : memref<88x128xf32, #tpu.memory_space<vmem>>, vector<1x128xf32>
    %119 = vector.broadcast %118 : vector<1x128xf32> to vector<8x128xf32>
    %120 = arith.addf %117, %119 : vector<8x128xf32>
    %c416 = arith.constant 416 : index
    %c0_42 = arith.constant 0 : index
    %121 = vector.load %arg2[%c416, %c0_42] : memref<544x128xbf16, #tpu.memory_space<vmem>>, vector<128x128xbf16>
    %cst_43 = arith.constant dense<0.000000e+00> : vector<8x128xf32>
    %122 = tpu.matmul %115, %121, %cst_43 {dimension_numbers = #tpu.dot_dimension_numbers<[1], [0], [0], [1], [0, 0, 1, 1], [], []>} : vector<8x128xbf16>, vector<128x128xbf16>, vector<8x128xf32> -> vector<8x128xf32>
    %c80 = arith.constant 80 : index
    %c0_44 = arith.constant 0 : index
    %123 = vector.load %arg3[%c80, %c0_44] : memref<88x128xf32, #tpu.memory_space<vmem>>, vector<1x128xf32>
    %124 = vector.broadcast %123 : vector<1x128xf32> to vector<8x128xf32>
    %125 = arith.addf %122, %124 : vector<8x128xf32>
    %126 = math.tanh %120 : vector<8x128xf32>
    %c0_45 = arith.constant 0 : index
    %c0_46 = arith.constant 0 : index
    %127 = vector.load %arg4[%c0_45, %c0_46] : memref<8x256xf32, #tpu.memory_space<vmem>>, vector<8x128xf32>
    tpu.vector_store %arg4[%c0_45, %c0_46], %126 {strides = array<i32>} : memref<8x256xf32, #tpu.memory_space<vmem>>, vector<8x128xf32>,
    %128 = math.tanh %125 : vector<8x128xf32>
    %c0_47 = arith.constant 0 : index
    %c128 = arith.constant 128 : index
    %129 = vector.load %arg4[%c0_47, %c128] : memref<8x256xf32, #tpu.memory_space<vmem>>, vector<8x128xf32>
    tpu.vector_store %arg4[%c0_47, %c128], %128 {strides = array<i32>} : memref<8x256xf32, #tpu.memory_space<vmem>>, vector<8x128xf32>,
    return
  }
  func.func @transform_0(%arg0: i32) -> (i32, i32) {
    %c0_i32 = arith.constant 0 : i32
    %c0_i32_0 = arith.constant 0 : i32
    return %arg0, %c0_i32 : i32, i32
  }
  func.func @transform_1(%arg0: i32) -> (i32, i32) {
    %c0_i32 = arith.constant 0 : i32
    %c0_i32_0 = arith.constant 0 : i32
    %c0_i32_1 = arith.constant 0 : i32
    return %c0_i32, %c0_i32_0 : i32, i32
  }
  func.func @transform_2(%arg0: i32) -> (i32, i32) {
    %c0_i32 = arith.constant 0 : i32
    %c0_i32_0 = arith.constant 0 : i32
    %c0_i32_1 = arith.constant 0 : i32
    return %c0_i32, %c0_i32_0 : i32, i32
  }
  func.func @transform_3(%arg0: i32) -> (i32, i32) {
    %c0_i32 = arith.constant 0 : i32
    %c0_i32_0 = arith.constant 0 : i32
    return %arg0, %c0_i32 : i32, i32
  }
}

</mosaic_0001>

<llo_original>
// kernel: _reconstruction_forward.1
$region0: #{_reconstruction_forward.1}
  #allocation0 [shape = 'u32[]', space=smem, size = 0x4, offset = 0x4, fixed_abs, tag = 'smem constant byte address 0x4 - core index']
  #allocation1 [shape = 'u32[144,128]{1,0:T(1,128)}', space=vmem, size = 0x12000, scoped, tag = 'internal scratch']
  %s0 = inlined_call_operand.hbm [shape: f32[8,32], index: 0, kind: input, shape index: {}]
  %s1 = inlined_call_operand.hbm [shape: bf16[544,128], index: 1, kind: input, shape index: {}]
  %s2 = inlined_call_operand.hbm [shape: f32[88,128], index: 2, kind: input, shape index: {}]
  %s3 = inlined_call_operand.vmem [shape: f32[8,256], index: 3, kind: output, shape index: {}]
  %s4 = sld [smem:[#allocation0]]
  $region34: #{_reconstruction_forward.1} parent=0
    _
  %s6 = ssub.s32 1, %s4
  %s7 = scalar_select 0, %s6, %s4
  $region1: #{_reconstruction_forward.1} parent=0
    #allocation2 [shape = 'u8[4096]{0}', space=vmem, size = 0x1000, scoped, tag = 'input window, operand 0, single buffered']
    #allocation3 [shape = 's32[1]{0}', space=sflag, size = 0x4, scoped, tag = 'scoped memory for _reconstruction_forward.1']
    #allocation4 [shape = 'u8[139264]{0}', space=vmem, size = 0x22000, scoped, tag = 'input window, operand 1, single buffered']
    #allocation5 [shape = 's32[1]{0}', space=sflag, size = 0x4, scoped, tag = 'scoped memory for _reconstruction_forward.1']
    #allocation6 [shape = 'u8[45056]{0}', space=vmem, size = 0xb000, scoped, tag = 'input window, operand 2, single buffered']
    %8 = vsyncpa [#allocation3], 0
    %9 = vsyncpa [#allocation5], 0
    // Predicated region
    $region2: #{_reconstruction_forward.1} parent=1 // pred_check
      _
    $region3: #{_reconstruction_forward.1} parent=1 // pred_check_branch
      %11 = sbr.rel (0) target = $region5
    $region4: #{_reconstruction_forward.1} parent=1 // pred_region
      %s13 = ssub.s32 128, 128
      %14 = vsyncadd [#allocation3], %s13
      %s16 = sshll.u32 [#allocation2], 4
      %s17 = int_to_ptr.vmem [resolvable:$true] %s16
      %19 = dma.hbm_to_vmem [thread:$0]  %s0, 128, %s17, [#allocation3]
    $region5: #{_reconstruction_forward.1} parent=1 // pred_fallthru
      _
    // Predicated region
    $region6: #{_reconstruction_forward.1} parent=1 // pred_check
      _
    $region7: #{_reconstruction_forward.1} parent=1 // pred_check_branch
      %21 = sbr.rel (0) target = $region9
    $region8: #{_reconstruction_forward.1} parent=1 // pred_region
      %s23 = ssub.s32 4352, 4352
      %24 = vsyncadd [#allocation5], %s23
      %s25 = sshll.u32 [#allocation4], 4
      %s26 = int_to_ptr.vmem [resolvable:$true] %s25
      %31 = dma.hbm_to_vmem [thread:$0]  %s1, 4352, %s26, [#allocation5], 64, 64, 4
    $region9: #{_reconstruction_forward.1} parent=1 // pred_fallthru
      _
    // Predicated region
    $region10: #{_reconstruction_forward.1} parent=1 // pred_check
      _
    $region11: #{_reconstruction_forward.1} parent=1 // pred_check_branch
      %33 = sbr.rel (0) target = $region13
    $region12: #{_reconstruction_forward.1} parent=1 // pred_region
      %s35 = ssub.s32 1408, 1408
      %36 = vsyncadd [#allocation5], %s35
      %s37 = sshll.u32 [#allocation6], 4
      %s38 = int_to_ptr.vmem [resolvable:$true] %s37
      %43 = dma.hbm_to_vmem [thread:$0]  %s2, 1408, %s38, [#allocation5], 128, 128, 8
    $region13: #{_reconstruction_forward.1} parent=1 // pred_fallthru
      _
    // Predicated region
    $region14: #{_reconstruction_forward.1} parent=1 // pred_check
      _
    $region15: #{_reconstruction_forward.1} parent=1 // pred_check_branch
      %45 = sbr.rel (0) target = $region17
    $region16: #{_reconstruction_forward.1} parent=1 // pred_region
      %46 = dma.done [#allocation3], 128
    $region17: #{_reconstruction_forward.1} parent=1 // pred_fallthru
      _
    // Predicated region
    $region18: #{_reconstruction_forward.1} parent=1 // pred_check
      _
    $region19: #{_reconstruction_forward.1} parent=1 // pred_check_branch
      %48 = sbr.rel (0) target = $region21
    $region20: #{_reconstruction_forward.1} parent=1 // pred_region
      %49 = dma.done [#allocation5], 4352
    $region21: #{_reconstruction_forward.1} parent=1 // pred_fallthru
      _
    // Predicated region
    $region22: #{_reconstruction_forward.1} parent=1 // pred_check
      _
    $region23: #{_reconstruction_forward.1} parent=1 // pred_check_branch
      %51 = sbr.rel (0) target = $region25
    $region24: #{_reconstruction_forward.1} parent=1 // pred_region
      %52 = dma.done [#allocation5], 1408
    $region25: #{_reconstruction_forward.1} parent=1 // pred_fallthru
      _
    %v54 = vld [vmem:[#allocation2] sm:$0xff]
    %v55 = vpack.c.bf16 %v54, %v54
    %v56 = vld [vmem:[#allocation4] sm:$0xf]
    %v57 = vld [vmem:[#allocation4 + $0x4] sm:$0xf]
    %v58 = vld [vmem:[#allocation4 + $0x8] sm:$0xf]
    %v59 = vld [vmem:[#allocation4 + $0xc] sm:$0xf]
    %v60 = vld [vmem:[#allocation6] sm:$0x1]
    %v61 = vlaneseq
    %v62 = vshrl.u32 %v61, 7
    %v63 = vsub.s32 0, %v62
    %v64 = vrot.slane %v60, %v63
    %v69 = vunpack.c.l.b16 %v56
    %v70 = vunpack.c.l.b16 %v57
    %v71 = vunpack.c.l.b16 %v58
    %v72 = vunpack.c.l.b16 %v59
    %v73 = vpack.c.b16 %v70, %v69
    %v74 = vpack.c.b16 %v72, %v71
    %vm77 = vcmask 261120
    %v79 = vsel %vm77, %v55, 0
    %81 = vmatprep.subr.bf16.mxu0 0
    %82 = vmatpush1.bf16.msra.mxu0 %v73
    %83 = vmatprep.subr.bf16.mxu0 0
    %84 = vmatpush1.bf16.msra.mxu0 %v74
    %85 = vmatprep.subr.bf16.mxu0 0
    %86 = vmatpush1.bf16.msra.mxu0 0
    %87 = vmatprep.subr.bf16.mxu0 0
    %88 = vmatpush1.bf16.msra.mxu0 0
    %89 = vmatprep.subr.bf16.mxu0 0
    %90 = vmatpush1.bf16.msra.mxu0 0
    %91 = vmatprep.subr.bf16.mxu0 0
    %92 = vmatpush1.bf16.msra.mxu0 0
    %93 = vmatprep.subr.bf16.mxu0 0
    %94 = vmatpush1.bf16.msra.mxu0 0
    %95 = vmatprep.subr.bf16.mxu0 0
    %96 = vmatpush1.bf16.msra.mxu0 0
    %97 = vmatprep.subr.bf16.mxu0 0
    %98 = vmatpush1.bf16.msra.mxu0 0
    %99 = vmatprep.subr.bf16.mxu0 0
    %100 = vmatpush1.bf16.msra.mxu0 0
    %101 = vmatprep.subr.bf16.mxu0 0
    %102 = vmatpush1.bf16.msra.mxu0 0
    %103 = vmatprep.subr.bf16.mxu0 0
    %104 = vmatpush1.bf16.msra.mxu0 0
    %105 = vmatprep.subr.bf16.mxu0 0
    %106 = vmatpush1.bf16.msra.mxu0 0
    %107 = vmatprep.subr.bf16.mxu0 0
    %108 = vmatpush1.bf16.msra.mxu0 0
    %109 = vmatprep.subr.bf16.mxu0 0
    %110 = vmatpush1.bf16.msra.mxu0 0
    %111 = vmatprep.subr.bf16.mxu0 0
    %112 = vmatpush1.bf16.msra.mxu0 0
    %113 = vmatprep.mubr.bf16.mxu0 0
    %114 = vmatmul.mubr.bf16.gmra.mrb[0].mxu0 %v79
    %v115 = vpop.f32.mrb[0].mxu0
    %v116 = vadd.f32 %v64, %v115
    %v117 = vpop.f32.mrb[0].mxu0
    %v118 = vpop.f32.mrb[0].mxu0
    %v119 = vpop.f32.mrb[0].mxu0
    %120 = vdwg.mxu0
    %v121 = vld [vmem:[#allocation6 + $0x8] sm:$0x1]
    %v122 = vld [vmem:[#allocation6 + $0x10] sm:$0x1]
    %123 = vadd.xlane.f32.xlu0 %v116
    %v124 = vpop.xlane.xlu0 %123
    %v125 = vmul.f32 %v116, %v116
    %126 = vadd.xlane.f32.xlu0 %v125
    %v127 = vpop.xlane.xlu0 %126
    %v128 = vmul.f32 %v124, 0.020833334
    %v129 = vmul.f32 %v127, 0.020833334
    %v130 = vmul.f32 %v128, %v128
    %v131 = vsub.f32 %v129, %v130
    %v132 = vmax.f32 %v131, 0.0
    %v133 = vsub.f32 %v116, %v128
    %v134 = vadd.f32 %v132, 1e-05
    %v135 = vrsqrt.pop %v134
    %v136 = vmul.f32 %v133, %v135
    %v137 = vlaneseq
    %v138 = vshrl.u32 %v137, 7
    %v139 = vsub.s32 0, %v138
    %v140 = vrot.slane %v121, %v139
    %v141 = vmul.f32 %v136, %v140
    %v142 = vlaneseq
    %v143 = vshrl.u32 %v142, 7
    %v144 = vsub.s32 0, %v143
    %v145 = vrot.slane %v122, %v144
    %v146 = vadd.f32 %v141, %v145
    %v147 = vxor.u32 %v146, 2147483648
    %v148 = vmul.f32 %v147, 1.442695
    %v149 = vpow.pop %v148
    %v150 = vadd.f32 %v149, 1.0
    %v151 = vrcp.pop %v150
    %v152 = vmul.f32 1.0, %v151
    %v153 = vmul.f32 %v146, %v152
    %v154 = vpack.c.bf16 %v153, %v153
    %v155 = vld [vmem:[#allocation4 + $0x10] sm:$0xf]
    %v156 = vld [vmem:[#allocation4 + $0x14] sm:$0xf]
    %v157 = vld [vmem:[#allocation4 + $0x18] sm:$0xf]
    %v158 = vld [vmem:[#allocation4 + $0x1c] sm:$0xf]
    %v159 = vld [vmem:[#allocation4 + $0x20] sm:$0xf]
    %v160 = vld [vmem:[#allocation4 + $0x24] sm:$0xf]
    %v161 = vld [vmem:[#allocation4 + $0x28] sm:$0xf]
    %v162 = vld [vmem:[#allocation4 + $0x2c] sm:$0xf]
    %v163 = vld [vmem:[#allocation4 + $0x30] sm:$0xf]
    %v164 = vld [vmem:[#allocation4 + $0x34] sm:$0xf]
    %v165 = vld [vmem:[#allocation4 + $0x38] sm:$0xf]
    %v166 = vld [vmem:[#allocation4 + $0x3c] sm:$0xf]
    %v167 = vld [vmem:[#allocation4 + $0x40] sm:$0xf]
    %v168 = vld [vmem:[#allocation4 + $0x44] sm:$0xf]
    %v169 = vld [vmem:[#allocation4 + $0x48] sm:$0xf]
    %v170 = vld [vmem:[#allocation4 + $0x4c] sm:$0xf]
    %v171 = vld [vmem:[#allocation6 + $0x18] sm:$0x1]
    %v172 = vlaneseq
    %v173 = vshrl.u32 %v172, 7
    %v174 = vsub.s32 0, %v173
    %v175 = vrot.slane %v171, %v174
    %v192 = vunpack.c.l.b16 %v155
    %v193 = vunpack.c.l.b16 %v156
    %v194 = vunpack.c.l.b16 %v157
    %v195 = vunpack.c.l.b16 %v158
    %v196 = vunpack.c.l.b16 %v159
    %v197 = vunpack.c.l.b16 %v160
    %v198 = vunpack.c.l.b16 %v161
    %v199 = vunpack.c.l.b16 %v162
    %v200 = vunpack.c.l.b16 %v163
    %v201 = vunpack.c.l.b16 %v164
    %v202 = vunpack.c.l.b16 %v165
    %v203 = vunpack.c.l.b16 %v166
    %v204 = vunpack.c.l.b16 %v167
    %v205 = vunpack.c.l.b16 %v168
    %v206 = vunpack.c.l.b16 %v169
    %v207 = vunpack.c.l.b16 %v170
    %v208 = vpack.c.b16 %v193, %v192
    %v209 = vpack.c.b16 %v195, %v194
    %v210 = vpack.c.b16 %v197, %v196
    %v211 = vpack.c.b16 %v199, %v198
    %v212 = vpack.c.b16 %v201, %v200
    %v213 = vpack.c.b16 %v203, %v202
    %v214 = vpack.c.b16 %v205, %v204
    %v215 = vpack.c.b16 %v207, %v206
    %224 = vmatprep.subr.bf16.mxu0 0
    %225 = vmatpush1.bf16.msra.mxu0 %v208
    %226 = vmatprep.subr.bf16.mxu0 0
    %227 = vmatpush1.bf16.msra.mxu0 %v209
    %228 = vmatprep.subr.bf16.mxu0 0
    %229 = vmatpush1.bf16.msra.mxu0 %v210
    %230 = vmatprep.subr.bf16.mxu0 0
    %231 = vmatpush1.bf16.msra.mxu0 %v211
    %232 = vmatprep.subr.bf16.mxu0 0
    %233 = vmatpush1.bf16.msra.mxu0 %v212
    %234 = vmatprep.subr.bf16.mxu0 0
    %235 = vmatpush1.bf16.msra.mxu0 %v213
    %236 = vmatprep.subr.bf16.mxu0 0
    %237 = vmatpush1.bf16.msra.mxu0 %v214
    %238 = vmatprep.subr.bf16.mxu0 0
    %239 = vmatpush1.bf16.msra.mxu0 %v215
    %240 = vmatprep.subr.bf16.mxu0 0
    %241 = vmatpush1.bf16.msra.mxu0 0
    %242 = vmatprep.subr.bf16.mxu0 0
    %243 = vmatpush1.bf16.msra.mxu0 0
    %244 = vmatprep.subr.bf16.mxu0 0
    %245 = vmatpush1.bf16.msra.mxu0 0
    %246 = vmatprep.subr.bf16.mxu0 0
    %247 = vmatpush1.bf16.msra.mxu0 0
    %248 = vmatprep.subr.bf16.mxu0 0
    %249 = vmatpush1.bf16.msra.mxu0 0
    %250 = vmatprep.subr.bf16.mxu0 0
    %251 = vmatpush1.bf16.msra.mxu0 0
    %252 = vmatprep.subr.bf16.mxu0 0
    %253 = vmatpush1.bf16.msra.mxu0 0
    %254 = vmatprep.subr.bf16.mxu0 0
    %255 = vmatpush1.bf16.msra.mxu0 0
    %256 = vmatprep.mubr.bf16.mxu0 0
    %257 = vmatmul.mubr.bf16.gmra.mrb[0].mxu0 %v154
    %v258 = vpop.f32.mrb[0].mxu0
    %v259 = vadd.f32 %v175, %v258
    %v260 = vpop.f32.mrb[0].mxu0
    %v261 = vpop.f32.mrb[0].mxu0
    %v262 = vpop.f32.mrb[0].mxu0
    %263 = vdwg.mxu0
    %v264 = vld [vmem:[#allocation6 + $0x20] sm:$0x1]
    %v265 = vld [vmem:[#allocation6 + $0x28] sm:$0x1]
    %266 = vadd.xlane.f32.xlu0 %v259
    %v267 = vpop.xlane.xlu0 %266
    %v268 = vmul.f32 %v259, %v259
    %269 = vadd.xlane.f32.xlu0 %v268
    %v270 = vpop.xlane.xlu0 %269
    %v271 = vmul.f32 %v267, 0.013888889
    %v272 = vmul.f32 %v270, 0.013888889
    %v273 = vmul.f32 %v271, %v271
    %v274 = vsub.f32 %v272, %v273
    %v275 = vmax.f32 %v274, 0.0
    %v276 = vsub.f32 %v259, %v271
    %v277 = vadd.f32 %v275, 1e-05
    %v278 = vrsqrt.pop %v277
    %v279 = vmul.f32 %v276, %v278
    %v280 = vlaneseq
    %v281 = vshrl.u32 %v280, 7
    %v282 = vsub.s32 0, %v281
    %v283 = vrot.slane %v264, %v282
    %v284 = vmul.f32 %v279, %v283
    %v285 = vlaneseq
    %v286 = vshrl.u32 %v285, 7
    %v287 = vsub.s32 0, %v286
    %v288 = vrot.slane %v265, %v287
    %v289 = vadd.f32 %v284, %v288
    %v290 = vxor.u32 %v289, 2147483648
    %v291 = vmul.f32 %v290, 1.442695
    %v292 = vpow.pop %v291
    %v293 = vadd.f32 %v292, 1.0
    %v294 = vrcp.pop %v293
    %v295 = vmul.f32 1.0, %v294
    %v296 = vmul.f32 %v289, %v295
    %v297 = vpack.c.bf16 %v296, %v296
    %v298 = vld [vmem:[#allocation4 + $0x50] sm:$0xf]
    %v299 = vld [vmem:[#allocation4 + $0x54] sm:$0xf]
    %v300 = vld [vmem:[#allocation4 + $0x58] sm:$0xf]
    %v301 = vld [vmem:[#allocation4 + $0x5c] sm:$0xf]
    %v302 = vld [vmem:[#allocation4 + $0x60] sm:$0xf]
    %v303 = vld [vmem:[#allocation4 + $0x64] sm:$0xf]
    %v304 = vld [vmem:[#allocation4 + $0x68] sm:$0xf]
    %v305 = vld [vmem:[#allocation4 + $0x6c] sm:$0xf]
    %v306 = vld [vmem:[#allocation4 + $0x70] sm:$0xf]
    %v307 = vld [vmem:[#allocation4 + $0x74] sm:$0xf]
    %v308 = vld [vmem:[#allocation4 + $0x78] sm:$0xf]
    %v309 = vld [vmem:[#allocation4 + $0x7c] sm:$0xf]
    %v310 = vld [vmem:[#allocation4 + $0x80] sm:$0xf]
    %v311 = vld [vmem:[#allocation4 + $0x84] sm:$0xf]
    %v312 = vld [vmem:[#allocation4 + $0x88] sm:$0xf]
    %v313 = vld [vmem:[#allocation4 + $0x8c] sm:$0xf]
    %v314 = vld [vmem:[#allocation6 + $0x30] sm:$0x1]
    %v315 = vlaneseq
    %v316 = vshrl.u32 %v315, 7
    %v317 = vsub.s32 0, %v316
    %v318 = vrot.slane %v314, %v317
    %v335 = vunpack.c.l.b16 %v298
    %v336 = vunpack.c.l.b16 %v299
    %v337 = vunpack.c.l.b16 %v300
    %v338 = vunpack.c.l.b16 %v301
    %v339 = vunpack.c.l.b16 %v302
    %v340 = vunpack.c.l.b16 %v303
    %v341 = vunpack.c.l.b16 %v304
    %v342 = vunpack.c.l.b16 %v305
    %v343 = vunpack.c.l.b16 %v306
    %v344 = vunpack.c.l.b16 %v307
    %v345 = vunpack.c.l.b16 %v308
    %v346 = vunpack.c.l.b16 %v309
    %v347 = vunpack.c.l.b16 %v310
    %v348 = vunpack.c.l.b16 %v311
    %v349 = vunpack.c.l.b16 %v312
    %v350 = vunpack.c.l.b16 %v313
    %v351 = vpack.c.b16 %v336, %v335
    %v352 = vpack.c.b16 %v338, %v337
    %v353 = vpack.c.b16 %v340, %v339
    %v354 = vpack.c.b16 %v342, %v341
    %v355 = vpack.c.b16 %v344, %v343
    %v356 = vpack.c.b16 %v346, %v345
    %v357 = vpack.c.b16 %v348, %v347
    %v358 = vpack.c.b16 %v350, %v349
    %367 = vmatprep.subr.bf16.mxu0 0
    %368 = vmatpush1.bf16.msra.mxu0 %v351
    %369 = vmatprep.subr.bf16.mxu0 0
    %370 = vmatpush1.bf16.msra.mxu0 %v352
    %371 = vmatprep.subr.bf16.mxu0 0
    %372 = vmatpush1.bf16.msra.mxu0 %v353
    %373 = vmatprep.subr.bf16.mxu0 0
    %374 = vmatpush1.bf16.msra.mxu0 %v354
    %375 = vmatprep.subr.bf16.mxu0 0
    %376 = vmatpush1.bf16.msra.mxu0 %v355
    %377 = vmatprep.subr.bf16.mxu0 0
    %378 = vmatpush1.bf16.msra.mxu0 %v356
    %379 = vmatprep.subr.bf16.mxu0 0
    %380 = vmatpush1.bf16.msra.mxu0 %v357
    %381 = vmatprep.subr.bf16.mxu0 0
    %382 = vmatpush1.bf16.msra.mxu0 %v358
    %383 = vmatprep.subr.bf16.mxu0 0
    %384 = vmatpush1.bf16.msra.mxu0 0
    %385 = vmatprep.subr.bf16.mxu0 0
    %386 = vmatpush1.bf16.msra.mxu0 0
    %387 = vmatprep.subr.bf16.mxu0 0
    %388 = vmatpush1.bf16.msra.mxu0 0
    %389 = vmatprep.subr.bf16.mxu0 0
    %390 = vmatpush1.bf16.msra.mxu0 0
    %391 = vmatprep.subr.bf16.mxu0 0
    %392 = vmatpush1.bf16.msra.mxu0 0
    %393 = vmatprep.subr.bf16.mxu0 0
    %394 = vmatpush1.bf16.msra.mxu0 0
    %395 = vmatprep.subr.bf16.mxu0 0
    %396 = vmatpush1.bf16.msra.mxu0 0
    %397 = vmatprep.subr.bf16.mxu0 0
    %398 = vmatpush1.bf16.msra.mxu0 0
    %399 = vmatprep.mubr.bf16.mxu0 0
    %400 = vmatmul.mubr.bf16.gmra.mrb[0].mxu0 %v297
    %v401 = vpop.f32.mrb[0].mxu0
    %v402 = vadd.f32 %v318, %v401
    %v403 = vpop.f32.mrb[0].mxu0
    %v404 = vpop.f32.mrb[0].mxu0
    %v405 = vpop.f32.mrb[0].mxu0
    %406 = vdwg.mxu0
    %v407 = vld [vmem:[#allocation6 + $0x38] sm:$0x1]
    %v408 = vld [vmem:[#allocation6 + $0x40] sm:$0x1]
    %409 = vadd.xlane.f32.xlu0 %v402
    %v410 = vpop.xlane.xlu0 %409
    %v411 = vmul.f32 %v402, %v402
    %412 = vadd.xlane.f32.xlu0 %v411
    %v413 = vpop.xlane.xlu0 %412
    %v414 = vmul.f32 %v410, 0.00862069
    %v415 = vmul.f32 %v413, 0.00862069
    %v416 = vmul.f32 %v414, %v414
    %v417 = vsub.f32 %v415, %v416
    %v418 = vmax.f32 %v417, 0.0
    %v419 = vsub.f32 %v402, %v414
    %v420 = vadd.f32 %v418, 1e-05
    %v421 = vrsqrt.pop %v420
    %v422 = vmul.f32 %v419, %v421
    %v423 = vlaneseq
    %v424 = vshrl.u32 %v423, 7
    %v425 = vsub.s32 0, %v424
    %v426 = vrot.slane %v407, %v425
    %v427 = vmul.f32 %v422, %v426
    %v428 = vlaneseq
    %v429 = vshrl.u32 %v428, 7
    %v430 = vsub.s32 0, %v429
    %v431 = vrot.slane %v408, %v430
    %v432 = vadd.f32 %v427, %v431
    %v433 = vxor.u32 %v432, 2147483648
    %v434 = vmul.f32 %v433, 1.442695
    %v435 = vpow.pop %v434
    %v436 = vadd.f32 %v435, 1.0
    %v437 = vrcp.pop %v436
    %v438 = vmul.f32 1.0, %v437
    %v439 = vmul.f32 %v432, %v438
    %v440 = vpack.c.bf16 %v439, %v439
    %v441 = vld [vmem:[#allocation4 + $0x90] sm:$0xf]
    %v442 = vld [vmem:[#allocation4 + $0x94] sm:$0xf]
    %v443 = vld [vmem:[#allocation4 + $0x98] sm:$0xf]
    %v444 = vld [vmem:[#allocation4 + $0x9c] sm:$0xf]
    %v445 = vld [vmem:[#allocation4 + $0xa0] sm:$0xf]
    %v446 = vld [vmem:[#allocation4 + $0xa4] sm:$0xf]
    %v447 = vld [vmem:[#allocation4 + $0xa8] sm:$0xf]
    %v448 = vld [vmem:[#allocation4 + $0xac] sm:$0xf]
    %v449 = vld [vmem:[#allocation4 + $0xb0] sm:$0xf]
    %v450 = vld [vmem:[#allocation4 + $0xb4] sm:$0xf]
    %v451 = vld [vmem:[#allocation4 + $0xb8] sm:$0xf]
    %v452 = vld [vmem:[#allocation4 + $0xbc] sm:$0xf]
    %v453 = vld [vmem:[#allocation4 + $0xc0] sm:$0xf]
    %v454 = vld [vmem:[#allocation4 + $0xc4] sm:$0xf]
    %v455 = vld [vmem:[#allocation4 + $0xc8] sm:$0xf]
    %v456 = vld [vmem:[#allocation4 + $0xcc] sm:$0xf]
    %v457 = vld [vmem:[#allocation6 + $0x48] sm:$0x1]
    %v458 = vlaneseq
    %v459 = vshrl.u32 %v458, 7
    %v460 = vsub.s32 0, %v459
    %v461 = vrot.slane %v457, %v460
    %v478 = vunpack.c.l.b16 %v441
    %v479 = vunpack.c.l.b16 %v442
    %v480 = vunpack.c.l.b16 %v443
    %v481 = vunpack.c.l.b16 %v444
    %v482 = vunpack.c.l.b16 %v445
    %v483 = vunpack.c.l.b16 %v446
    %v484 = vunpack.c.l.b16 %v447
    %v485 = vunpack.c.l.b16 %v448
    %v486 = vunpack.c.l.b16 %v449
    %v487 = vunpack.c.l.b16 %v450
    %v488 = vunpack.c.l.b16 %v451
    %v489 = vunpack.c.l.b16 %v452
    %v490 = vunpack.c.l.b16 %v453
    %v491 = vunpack.c.l.b16 %v454
    %v492 = vunpack.c.l.b16 %v455
    %v493 = vunpack.c.l.b16 %v456
    %v494 = vpack.c.b16 %v479, %v478
    %v495 = vpack.c.b16 %v481, %v480
    %v496 = vpack.c.b16 %v483, %v482
    %v497 = vpack.c.b16 %v485, %v484
    %v498 = vpack.c.b16 %v487, %v486
    %v499 = vpack.c.b16 %v489, %v488
    %v500 = vpack.c.b16 %v491, %v490
    %v501 = vpack.c.b16 %v493, %v492
    %510 = vmatprep.subr.bf16.mxu0 0
    %511 = vmatpush1.bf16.msra.mxu0 %v494
    %512 = vmatprep.subr.bf16.mxu0 0
    %513 = vmatpush1.bf16.msra.mxu0 %v495
    %514 = vmatprep.subr.bf16.mxu0 0
    %515 = vmatpush1.bf16.msra.mxu0 %v496
    %516 = vmatprep.subr.bf16.mxu0 0
    %517 = vmatpush1.bf16.msra.mxu0 %v497
    %518 = vmatprep.subr.bf16.mxu0 0
    %519 = vmatpush1.bf16.msra.mxu0 %v498
    %520 = vmatprep.subr.bf16.mxu0 0
    %521 = vmatpush1.bf16.msra.mxu0 %v499
    %522 = vmatprep.subr.bf16.mxu0 0
    %523 = vmatpush1.bf16.msra.mxu0 %v500
    %524 = vmatprep.subr.bf16.mxu0 0
    %525 = vmatpush1.bf16.msra.mxu0 %v501
    %526 = vmatprep.subr.bf16.mxu0 0
    %527 = vmatpush1.bf16.msra.mxu0 0
    %528 = vmatprep.subr.bf16.mxu0 0
    %529 = vmatpush1.bf16.msra.mxu0 0
    %530 = vmatprep.subr.bf16.mxu0 0
    %531 = vmatpush1.bf16.msra.mxu0 0
    %532 = vmatprep.subr.bf16.mxu0 0
    %533 = vmatpush1.bf16.msra.mxu0 0
    %534 = vmatprep.subr.bf16.mxu0 0
    %535 = vmatpush1.bf16.msra.mxu0 0
    %536 = vmatprep.subr.bf16.mxu0 0
    %537 = vmatpush1.bf16.msra.mxu0 0
    %538 = vmatprep.subr.bf16.mxu0 0
    %539 = vmatpush1.bf16.msra.mxu0 0
    %540 = vmatprep.subr.bf16.mxu0 0
    %541 = vmatpush1.bf16.msra.mxu0 0
    %542 = vmatprep.mubr.bf16.mxu0 0
    %543 = vmatmul.mubr.bf16.gmra.mrb[0].mxu0 %v440
    %v544 = vpop.f32.mrb[0].mxu0
    %v545 = vadd.f32 %v461, %v544
    %v546 = vpop.f32.mrb[0].mxu0
    %v547 = vpop.f32.mrb[0].mxu0
    %v548 = vpop.f32.mrb[0].mxu0
    %549 = vdwg.mxu0
    %v550 = vld [vmem:[#allocation4 + $0xd0] sm:$0xf]
    %v551 = vld [vmem:[#allocation4 + $0xd4] sm:$0xf]
    %v552 = vld [vmem:[#allocation4 + $0xd8] sm:$0xf]
    %v553 = vld [vmem:[#allocation4 + $0xdc] sm:$0xf]
    %v554 = vld [vmem:[#allocation4 + $0xe0] sm:$0xf]
    %v555 = vld [vmem:[#allocation4 + $0xe4] sm:$0xf]
    %v556 = vld [vmem:[#allocation4 + $0xe8] sm:$0xf]
    %v557 = vld [vmem:[#allocation4 + $0xec] sm:$0xf]
    %v558 = vld [vmem:[#allocation4 + $0xf0] sm:$0xf]
    %v559 = vld [vmem:[#allocation4 + $0xf4] sm:$0xf]
    %v560 = vld [vmem:[#allocation4 + $0xf8] sm:$0xf]
    %v561 = vld [vmem:[#allocation4 + $0xfc] sm:$0xf]
    %v562 = vld [vmem:[#allocation4 + $0x100] sm:$0xf]
    %v563 = vld [vmem:[#allocation4 + $0x104] sm:$0xf]
    %v564 = vld [vmem:[#allocation4 + $0x108] sm:$0xf]
    %v565 = vld [vmem:[#allocation4 + $0x10c] sm:$0xf]
    %v566 = vld [vmem:[#allocation6 + $0x50] sm:$0x1]
    %v567 = vlaneseq
    %v568 = vshrl.u32 %v567, 7
    %v569 = vsub.s32 0, %v568
    %v570 = vrot.slane %v566, %v569
    %v587 = vunpack.c.l.b16 %v550
    %v588 = vunpack.c.l.b16 %v551
    %v589 = vunpack.c.l.b16 %v552
    %v590 = vunpack.c.l.b16 %v553
    %v591 = vunpack.c.l.b16 %v554
    %v592 = vunpack.c.l.b16 %v555
    %v593 = vunpack.c.l.b16 %v556
    %v594 = vunpack.c.l.b16 %v557
    %v595 = vunpack.c.l.b16 %v558
    %v596 = vunpack.c.l.b16 %v559
    %v597 = vunpack.c.l.b16 %v560
    %v598 = vunpack.c.l.b16 %v561
    %v599 = vunpack.c.l.b16 %v562
    %v600 = vunpack.c.l.b16 %v563
    %v601 = vunpack.c.l.b16 %v564
    %v602 = vunpack.c.l.b16 %v565
    %v603 = vpack.c.b16 %v588, %v587
    %v604 = vpack.c.b16 %v590, %v589
    %v605 = vpack.c.b16 %v592, %v591
    %v606 = vpack.c.b16 %v594, %v593
    %v607 = vpack.c.b16 %v596, %v595
    %v608 = vpack.c.b16 %v598, %v597
    %v609 = vpack.c.b16 %v600, %v599
    %v610 = vpack.c.b16 %v602, %v601
    %619 = vmatprep.subr.bf16.mxu0 0
    %620 = vmatpush1.bf16.msra.mxu0 %v603
    %621 = vmatprep.subr.bf16.mxu0 0
    %622 = vmatpush1.bf16.msra.mxu0 %v604
    %623 = vmatprep.subr.bf16.mxu0 0
    %624 = vmatpush1.bf16.msra.mxu0 %v605
    %625 = vmatprep.subr.bf16.mxu0 0
    %626 = vmatpush1.bf16.msra.mxu0 %v606
    %627 = vmatprep.subr.bf16.mxu0 0
    %628 = vmatpush1.bf16.msra.mxu0 %v607
    %629 = vmatprep.subr.bf16.mxu0 0
    %630 = vmatpush1.bf16.msra.mxu0 %v608
    %631 = vmatprep.subr.bf16.mxu0 0
    %632 = vmatpush1.bf16.msra.mxu0 %v609
    %633 = vmatprep.subr.bf16.mxu0 0
    %634 = vmatpush1.bf16.msra.mxu0 %v610
    %635 = vmatprep.subr.bf16.mxu0 0
    %636 = vmatpush1.bf16.msra.mxu0 0
    %637 = vmatprep.subr.bf16.mxu0 0
    %638 = vmatpush1.bf16.msra.mxu0 0
    %639 = vmatprep.subr.bf16.mxu0 0
    %640 = vmatpush1.bf16.msra.mxu0 0
    %641 = vmatprep.subr.bf16.mxu0 0
    %642 = vmatpush1.bf16.msra.mxu0 0
    %643 = vmatprep.subr.bf16.mxu0 0
    %644 = vmatpush1.bf16.msra.mxu0 0
    %645 = vmatprep.subr.bf16.mxu0 0
    %646 = vmatpush1.bf16.msra.mxu0 0
    %647 = vmatprep.subr.bf16.mxu0 0
    %648 = vmatpush1.bf16.msra.mxu0 0
    %649 = vmatprep.subr.bf16.mxu0 0
    %650 = vmatpush1.bf16.msra.mxu0 0
    %651 = vmatprep.mubr.bf16.mxu0 0
    %652 = vmatmul.mubr.bf16.gmra.mrb[0].mxu0 %v440
    %v653 = vpop.f32.mrb[0].mxu0
    %v654 = vadd.f32 %v570, %v653
    %v655 = vpop.f32.mrb[0].mxu0
    %v656 = vpop.f32.mrb[0].mxu0
    %v657 = vpop.f32.mrb[0].mxu0
    %658 = vdwg.mxu0
    %v659 = vtanh.pop %v545
    %660 = vst [vmem:[%s3] sm:$0xff] %v659
    %v661 = vtanh.pop %v654
    %662 = vst [vmem:[%s3 + $0x8] sm:$0xff] %v661
    // Predicated region
    $region26: #{_reconstruction_forward.1} parent=1 // pred_check
      _
    $region27: #{_reconstruction_forward.1} parent=1 // pred_check_branch
      %664 = sbr.rel (0) target = $region29
    $region28: #{_reconstruction_forward.1} parent=1 // pred_region
      _
    $region29: #{_reconstruction_forward.1} parent=1 // pred_fallthru
      _
    // Predicated region
    $region30: #{_reconstruction_forward.1} parent=1 // pred_check
      _
    $region31: #{_reconstruction_forward.1} parent=1 // pred_check_branch
      %666 = sbr.rel (0) target = $region33
    $region32: #{_reconstruction_forward.1} parent=1 // pred_region
      _
    $region33: #{_reconstruction_forward.1} parent=1 // pred_fallthru
      _
    %667 = vsyncpa [#allocation3], 1
    %668 = vsyncpa [#allocation5], 1

</llo_original>
